<compile_context>
chip_gen: v6e
topology: v6e:2x2x1
jax: 0.10.0
libtpu: 0.0.40
codegen_flags: <defaults>
</compile_context>

<pallas_src>
import functools

import numpy as np
import jax
import jax.numpy as jnp
from jax import lax
from jax.experimental import pallas as pl
from jax.experimental.pallas import tpu as pltpu

_LANES = 128
_SUBLANES = 8
_MAX_TILE_ROWS = 1024  # 1024x128 f32 = 512 KiB/block; ~2 MiB double-buffered in+out.


def _bounds(bits, signed):
    val = 2 ** (bits - 1)
    if signed:
        return -val, val - 1
    return 0, 2 * val - 1


def _round_up(x, m):
    return ((x + m - 1) // m) * m


def _qlayer_kernel(scal_ref, nvalid_ref, x_ref, xq_ref, cnt_ref, *,
                   n_lo, p_hi, nbins, tile_rows):
    """Fake-quant one (tile_rows, 128) block + per-bin / per-lane partial counts."""
    step = pl.program_id(0)
    s = scal_ref[0]        # step size
    inv_s = scal_ref[1]    # 1/s, precomputed in the wrapper (hoisted divide)

    x = x_ref[...]
    # bins(x) = clip(x / s, n, p).round();  clip(x) = bins(x) * s   (hot path)
    bins = jnp.round(jnp.clip(x * inv_s, float(n_lo), float(p_hi)))
    xq_ref[...] = bins * s

    # Mask out-of-range elements (lane pad and/or partial last tile) from the counts by
    # sending them to bin p+1, which is never counted (br_loss covers bins n .. p-1).
    row = lax.broadcasted_iota(jnp.int32, x.shape, 0)
    lane = lax.broadcasted_iota(jnp.int32, x.shape, 1)
    gidx = (step * tile_rows + row) * _LANES + lane
    bins_cnt = jnp.where(gidx < nvalid_ref[0], bins, jnp.float32(p_hi + 1))

    # Per-block stats slot: row b = per-lane counts of bin (n_lo + b).  The wrapper sums
    # over blocks and lanes; sum / sumsq / var are reconstructed analytically there.
    cnt_ref[...] = jnp.zeros_like(cnt_ref)
    # TODO(synk): for large bit-widths (nbins >= ~16) replace this static unroll with an
    # MXU one-hot histogram; for small nbins the unrolled compare+row-sum is cheapest.
    for b in range(nbins):
        lane_cnt = jnp.sum((bins_cnt == jnp.float32(n_lo + b)).astype(jnp.float32),
                           axis=0, keepdims=True)            # (1, 128)
        cnt_ref[0, b:b + 1, :] = lane_cnt


def qlayer_forward(x, *, bits, signed=True, s=None):
    n_lo, p_hi = _bounds(bits, signed)
    nbins = p_hi - n_lo  # torch.arange(n, p) iterates bins n .. p-1

    x = x.astype(jnp.float32)
    if s is None:
        # initialize_s (parameter init, glue): s = 2 * mean(x) / sqrt(p)
        s = 2.0 * jnp.mean(x.reshape(-1)) / jnp.sqrt(jnp.float32(p_hi))
    s = jnp.asarray(s, jnp.float32).reshape(())
    inv_s = 1.0 / s
    scal = jnp.stack([s, inv_s]).astype(jnp.float32)          # SMEM scalars

    flat = x.reshape(-1)
    n_elem = flat.shape[0]
    lane_pad = (-n_elem) % _LANES
    if lane_pad:
        # TODO(synk): only hit when numel % 128 != 0; pads at most 127 elements.
        flat = jnp.pad(flat, (0, lane_pad))
    rows = flat.shape[0] // _LANES
    x2d = flat.reshape(rows, _LANES)

    tile_rows = min(_MAX_TILE_ROWS, _round_up(rows, _SUBLANES))
    num_blocks = pl.cdiv(rows, tile_rows)
    stat_rows = max(_SUBLANES, _round_up(nbins, _SUBLANES))
    n_valid = jnp.full((1,), n_elem, jnp.int32)

    kernel = functools.partial(_qlayer_kernel, n_lo=n_lo, p_hi=p_hi,
                               nbins=nbins, tile_rows=tile_rows)
    xq2d, stats = pl.pallas_call(
        kernel,
        out_shape=(
            jax.ShapeDtypeStruct((rows, _LANES), jnp.float32),
            jax.ShapeDtypeStruct((num_blocks, stat_rows, _LANES), jnp.float32),
        ),
        grid=(num_blocks,),
        in_specs=[
            pl.BlockSpec(memory_space=pltpu.MemorySpace.SMEM),        # [s, 1/s]
            pl.BlockSpec(memory_space=pltpu.MemorySpace.SMEM),        # n_valid
            pl.BlockSpec((tile_rows, _LANES), lambda i: (i, 0)),      # x tile
        ],
        out_specs=(
            pl.BlockSpec((tile_rows, _LANES), lambda i: (i, 0)),      # quantized x
            pl.BlockSpec((1, stat_rows, _LANES), lambda i: (i, 0, 0)),  # per-block counts
        ),
        compiler_params=pltpu.CompilerParams(dimension_semantics=("parallel",)),
    )(scal, n_valid, x2d)

    if lane_pad:
        xq = xq2d.reshape(-1)[:n_elem].reshape(x.shape)
    else:
        xq = xq2d.reshape(x.shape)
    # TODO(synk): QLayer.forward calls self.net(x) but `net` is never defined in
    # __init__; treated as identity here.
    out = xq

    # br_loss finalization (vectorized over bins).  Every member of bin b is exactly
    # (n_lo + b) * s, so mse = (bin_val - center)^2 (NaN for an empty bin, matching
    # torch's mean of an empty tensor) and var is exactly 0.
    counts = jnp.sum(stats[:, :nbins, :], axis=(0, 2))                 # (nbins,)
    b = jnp.arange(nbins, dtype=jnp.float32)
    bin_val = (jnp.float32(n_lo) + b) * s
    # bin_center = n + s/2 + b*s  (n added un-scaled, exactly as in the torch code)
    center = jnp.float32(n_lo) + s / 2.0 + b * s
    mse = jnp.where(counts > 0.0, (bin_val - center) ** 2, jnp.float32(jnp.nan))
    loss = jnp.sum(mse)
    return out, loss, s


def qlayer_reference(x, *, bits, signed=True):
    """Pure-JAX reference mirroring the PyTorch module (net == identity)."""
    n_lo, p_hi = _bounds(bits, signed)
    x = x.astype(jnp.float32)
    s = 2.0 * jnp.mean(x.reshape(-1)) / jnp.sqrt(jnp.float32(p_hi))
    bins = jnp.round(jnp.clip(x / s, n_lo, p_hi))
    out = bins * s
    flat = out.reshape(-1)
    fb = jnp.round(jnp.clip(flat / s, n_lo, p_hi))
    loss = jnp.float32(0.0)
    center = n_lo + s / 2.0
    for i in range(n_lo, p_hi):
        mask = fb == i
        cnt = jnp.sum(mask.astype(jnp.float32))
        mse = jnp.sum(jnp.where(mask, (flat - center) ** 2, 0.0)) / cnt
        mean_b = jnp.sum(jnp.where(mask, flat, 0.0)) / jnp.maximum(cnt, 1.0)
        var = jnp.sum(jnp.where(mask, (flat - mean_b) ** 2, 0.0)) / jnp.maximum(cnt - 1.0, 1.0)
        var = jnp.where(cnt > 1.0, var, 0.0)
        loss = loss + mse + var
        center = center + s
    return out, loss


if __name__ == "__main__":
    key = jax.random.PRNGKey(0)
    # Positive data so the data-derived step size s is positive and all loss bins
    # are populated (otherwise torch's mean-of-empty would make the loss NaN).
    x = jax.random.uniform(key, (2, 4, 16, 16), dtype=jnp.float32,
                           minval=0.1, maxval=1.0)

    out, loss, s = qlayer_forward(x, bits=2, signed=False)
    jax.block_until_ready((out, loss))

    ref_out, ref_loss = qlayer_reference(x, bits=2, signed=False)
    np.testing.assert_allclose(np.asarray(out), np.asarray(ref_out),
                               rtol=1e-5, atol=1e-6)
    np.testing.assert_allclose(float(loss), float(ref_loss),
                               rtol=2e-3, atol=1e-4)

    print("KERNEL_OK")
</pallas_src>

<mosaic_0001>
module attributes {stable_mosaic.version = 11 : i64} {
  func.func @_qlayer_kernel(%arg0: i32, %arg1: memref<2xf32, #tpu.memory_space<smem>>, %arg2: memref<1xi32, #tpu.memory_space<smem>>, %arg3: memref<16x128xf32, #tpu.memory_space<vmem>>, %arg4: memref<16x128xf32, #tpu.memory_space<vmem>>, %arg5: memref<1x8x128xf32, #tpu.memory_space<vmem>>) attributes {dimension_semantics = [#tpu.dimension_semantics<parallel>], iteration_bounds = array<i64: 1>, scalar_prefetch = 0 : i64, scratch_operands = 0 : i64, tpu.core_type = #tpu.core_type<tc>, window_params = [{transform_indices = @transform_0, window_bounds = array<i64: 2>}, {transform_indices = @transform_1, window_bounds = array<i64: 1>}, {transform_indices = @transform_2, window_bounds = array<i64: 16, 128>}, {transform_indices = @transform_3, window_bounds = array<i64: 16, 128>}, {transform_indices = @transform_4, window_bounds = array<i64: 1, 8, 128>}]} {
    %c0 = arith.constant 0 : index
    %0 = memref.load %arg1[%c0] : memref<2xf32, #tpu.memory_space<smem>>
    %c1 = arith.constant 1 : index
    %1 = memref.load %arg1[%c1] : memref<2xf32, #tpu.memory_space<smem>>
    %c0_0 = arith.constant 0 : index
    %c0_1 = arith.constant 0 : index
    %2 = vector.load %arg3[%c0_0, %c0_1] : memref<16x128xf32, #tpu.memory_space<vmem>>, vector<16x128xf32>
    %3 = vector.broadcast %1 : f32 to vector<16x128xf32>
    %4 = arith.mulf %2, %3 : vector<16x128xf32>
    %cst = arith.constant 0.000000e+00 : f32
    %cst_2 = arith.constant 3.000000e+00 : f32
    %5 = vector.broadcast %cst : f32 to vector<16x128xf32>
    %6 = arith.maximumf %5, %4 : vector<16x128xf32>
    %7 = vector.broadcast %cst_2 : f32 to vector<16x128xf32>
    %8 = arith.minimumf %7, %6 : vector<16x128xf32>
    %9 = math.roundeven %8 : vector<16x128xf32>
    %10 = vector.broadcast %0 : f32 to vector<16x128xf32>
    %11 = arith.mulf %9, %10 : vector<16x128xf32>
    %c0_3 = arith.constant 0 : index
    %c0_4 = arith.constant 0 : index
    %12 = vector.load %arg4[%c0_3, %c0_4] : memref<16x128xf32, #tpu.memory_space<vmem>>, vector<16x128xf32>
    tpu.vector_store %arg4[%c0_3, %c0_4], %11 {strides = array<i32>} : memref<16x128xf32, #tpu.memory_space<vmem>>, vector<16x128xf32>,
    %13 = tpu.iota {dimensions = array<i32: 0>} : vector<16x128xi32>
    %14 = tpu.iota {dimensions = array<i32: 1>} : vector<16x128xi32>
    %c16_i32 = arith.constant 16 : i32
    %15 = arith.muli %arg0, %c16_i32 : i32
    %16 = vector.broadcast %15 : i32 to vector<16x128xi32>
    %17 = arith.addi %16, %13 : vector<16x128xi32>
    %c128_i32 = arith.constant 128 : i32
    %18 = vector.broadcast %c128_i32 : i32 to vector<16x128xi32>
    %19 = arith.muli %17, %18 : vector<16x128xi32>
    %20 = arith.addi %19, %14 : vector<16x128xi32>
    %c0_5 = arith.constant 0 : index
    %21 = memref.load %arg2[%c0_5] : memref<1xi32, #tpu.memory_space<smem>>
    %22 = vector.broadcast %21 : i32 to vector<16x128xi32>
    %23 = arith.cmpi slt, %20, %22 : vector<16x128xi32>
    %cst_6 = arith.constant 4.000000e+00 : f32
    %24 = vector.broadcast %cst_6 : f32 to vector<16x128xf32>
    %25 = arith.select %23, %9, %24 : vector<16x128xi1>, vector<16x128xf32>
    %cst_7 = arith.constant 0.000000e+00 : f32
    %26 = vector.broadcast %cst_7 : f32 to vector<1x8x128xf32>
    %c0_8 = arith.constant 0 : index
    %c0_9 = arith.constant 0 : index
    %c0_10 = arith.constant 0 : index
    %27 = vector.load %arg5[%c0_8, %c0_9, %c0_10] : memref<1x8x128xf32, #tpu.memory_space<vmem>>, vector<1x8x128xf32>
    tpu.vector_store %arg5[%c0_8, %c0_9, %c0_10], %26 {strides = array<i32>} : memref<1x8x128xf32, #tpu.memory_space<vmem>>, vector<1x8x128xf32>,
    %cst_11 = arith.constant 0.000000e+00 : f32
    %28 = vector.broadcast %cst_11 : f32 to vector<16x128xf32>
    %29 = arith.cmpf oeq, %25, %28 : vector<16x128xf32>
    %30 = arith.extui %29 : vector<16x128xi1> to vector<16x128xi32>
    %31 = arith.sitofp %30 : vector<16x128xi32> to vector<16x128xf32>
    %cst_12 = arith.constant dense<0.000000e+00> : vector<128xf32>
    %32 = vector.multi_reduction <add>, %31, %cst_12 [0] : vector<16x128xf32> to vector<128xf32>
    %33 = vector.shape_cast %32 : vector<128xf32> to vector<1x128xf32>
    %c0_13 = arith.constant 0 : index
    %c0_14 = arith.constant 0 : index
    %c0_15 = arith.constant 0 : index
    %34 = vector.load %arg5[%c0_13, %c0_14, %c0_15] : memref<1x8x128xf32, #tpu.memory_space<vmem>>, vector<1x1x128xf32>
    %35 = vector.shape_cast %34 : vector<1x1x128xf32> to vector<1x128xf32>
    %36 = vector.shape_cast %33 : vector<1x128xf32> to vector<1x1x128xf32>
    tpu.vector_store %arg5[%c0_13, %c0_14, %c0_15], %36 {strides = array<i32>} : memref<1x8x128xf32, #tpu.memory_space<vmem>>, vector<1x1x128xf32>,
    %cst_16 = arith.constant 1.000000e+00 : f32
    %37 = vector.broadcast %cst_16 : f32 to vector<16x128xf32>
    %38 = arith.cmpf oeq, %25, %37 : vector<16x128xf32>
    %39 = arith.extui %38 : vector<16x128xi1> to vector<16x128xi32>
    %40 = arith.sitofp %39 : vector<16x128xi32> to vector<16x128xf32>
    %cst_17 = arith.constant dense<0.000000e+00> : vector<128xf32>
    %41 = vector.multi_reduction <add>, %40, %cst_17 [0] : vector<16x128xf32> to vector<128xf32>
    %42 = vector.shape_cast %41 : vector<128xf32> to vector<1x128xf32>
    %c0_18 = arith.constant 0 : index
    %c1_19 = arith.constant 1 : index
    %c0_20 = arith.constant 0 : index
    %43 = vector.load %arg5[%c0_18, %c1_19, %c0_20] : memref<1x8x128xf32, #tpu.memory_space<vmem>>, vector<1x1x128xf32>
    %44 = vector.shape_cast %43 : vector<1x1x128xf32> to vector<1x128xf32>
    %45 = vector.shape_cast %42 : vector<1x128xf32> to vector<1x1x128xf32>
    tpu.vector_store %arg5[%c0_18, %c1_19, %c0_20], %45 {strides = array<i32>} : memref<1x8x128xf32, #tpu.memory_space<vmem>>, vector<1x1x128xf32>,
    %cst_21 = arith.constant 2.000000e+00 : f32
    %46 = vector.broadcast %cst_21 : f32 to vector<16x128xf32>
    %47 = arith.cmpf oeq, %25, %46 : vector<16x128xf32>
    %48 = arith.extui %47 : vector<16x128xi1> to vector<16x128xi32>
    %49 = arith.sitofp %48 : vector<16x128xi32> to vector<16x128xf32>
    %cst_22 = arith.constant dense<0.000000e+00> : vector<128xf32>
    %50 = vector.multi_reduction <add>, %49, %cst_22 [0] : vector<16x128xf32> to vector<128xf32>
    %51 = vector.shape_cast %50 : vector<128xf32> to vector<1x128xf32>
    %c0_23 = arith.constant 0 : index
    %c2 = arith.constant 2 : index
    %c0_24 = arith.constant 0 : index
    %52 = vector.load %arg5[%c0_23, %c2, %c0_24] : memref<1x8x128xf32, #tpu.memory_space<vmem>>, vector<1x1x128xf32>
    %53 = vector.shape_cast %52 : vector<1x1x128xf32> to vector<1x128xf32>
    %54 = vector.shape_cast %51 : vector<1x128xf32> to vector<1x1x128xf32>
    tpu.vector_store %arg5[%c0_23, %c2, %c0_24], %54 {strides = array<i32>} : memref<1x8x128xf32, #tpu.memory_space<vmem>>, vector<1x1x128xf32>,
    return
  }
  func.func @transform_0(%arg0: i32) -> i32 {
    %c0_i32 = arith.constant 0 : i32
    %c0_i32_0 = arith.constant 0 : i32
    return %c0_i32 : i32
  }
  func.func @transform_1(%arg0: i32) -> i32 {
    %c0_i32 = arith.constant 0 : i32
    %c0_i32_0 = arith.constant 0 : i32
    return %c0_i32 : i32
  }
  func.func @transform_2(%arg0: i32) -> (i32, i32) {
    %c0_i32 = arith.constant 0 : i32
    %c0_i32_0 = arith.constant 0 : i32
    return %arg0, %c0_i32 : i32, i32
  }
  func.func @transform_3(%arg0: i32) -> (i32, i32) {
    %c0_i32 = arith.constant 0 : i32
    %c0_i32_0 = arith.constant 0 : i32
    return %arg0, %c0_i32 : i32, i32
  }
  func.func @transform_4(%arg0: i32) -> (i32, i32, i32) {
    %c0_i32 = arith.constant 0 : i32
    %c0_i32_0 = arith.constant 0 : i32
    %c0_i32_1 = arith.constant 0 : i32
    return %arg0, %c0_i32, %c0_i32_0 : i32, i32, i32
  }
}

</mosaic_0001>

<llo_original>
// kernel: tpu_custom_call.1
$region0: #{tpu_custom_call.1}
  #allocation0 [shape = 'u32[]', space=smem, size = 0x4, offset = 0x4, fixed_abs, tag = 'smem constant byte address 0x4 - core index']
  #allocation1 [shape = 'u32[144,128]{1,0:T(1,128)}', space=vmem, size = 0x12000, scoped, tag = 'internal scratch']
  #allocation2 [shape = 's32[1]{0:T(128)S(6)}', space=smem, size = 0x200, scoped, tag = 'scoped memory for tpu_custom_call.1']
  %s0 = inlined_call_operand.vmem [shape: f32[2], index: 0, kind: input, shape index: {}]
  %s1 = inlined_call_operand.<no memory space> [shape: s32[1], index: 1, kind: input, shape index: {}]
  %s2 = inlined_call_operand.hbm [shape: f32[16,128], index: 2, kind: input, shape index: {}]
  %s3 = inlined_call_operand.hbm [shape: f32[16,128], index: 3, kind: output, shape index: {0}]
  %s4 = inlined_call_operand.hbm [shape: f32[1,8,128], index: 4, kind: output, shape index: {1}]
  %5 = xla_tuple %s3, %s4
  %s6 = sld [smem:[#allocation0]]
  $region38: #{tpu_custom_call.1} parent=0
    _
  %s8 = ssub.s32 1, %s6
  %s9 = scalar_select 0, %s8, %s6
  %10 = sst [smem:[#allocation2]] %s1
  $region1: #{tpu_custom_call.1} parent=0
    #allocation3 [shape = 'u8[512]{0}', space=smem, size = 0x200, scoped, tag = 'input window, operand 0, single buffered']
    #allocation4 [shape = 's32[1]{0}', space=sflag, size = 0x4, scoped, tag = 'scoped memory for tpu_custom_call.1']
    #allocation5 [shape = 's32[1]{0}', space=sflag, size = 0x4, scoped, tag = 'scoped memory for tpu_custom_call.1']
    #allocation6 [shape = 's32[1]{0}', space=sflag, size = 0x4, scoped, tag = 'scoped memory for tpu_custom_call.1']
    #allocation7 [shape = 'u8[8192]{0}', space=vmem, size = 0x2000, scoped, tag = 'input window, operand 2, single buffered']
    #allocation8 [shape = 'u8[8192]{0}', space=vmem, size = 0x2000, scoped, tag = 'output window, operand 0, single buffered']
    #allocation9 [shape = 'u8[4096]{0}', space=vmem, size = 0x1000, scoped, tag = 'output window, operand 1, single buffered']
    #allocation10 [shape = 's32[1]{0}', space=sflag, size = 0x4, scoped, tag = 'scoped memory for tpu_custom_call.1']
    %11 = vsyncpa [#allocation6], 0
    %12 = vsyncpa [#allocation4], 0
    %13 = vsyncpa [#allocation5], 0
    %14 = vsyncpa [#allocation10], 0
    // Predicated region
    $region2: #{tpu_custom_call.1} parent=1 // pred_check
      _
    $region3: #{tpu_custom_call.1} parent=1 // pred_check_branch
      %16 = sbr.rel (0) target = $region5
    $region4: #{tpu_custom_call.1} parent=1 // pred_region
      %s18 = ssub.s32 16, 16
      %19 = vsyncadd [#allocation6], %s18
      %s21 = sshll.u32 %s0, 4
      %s22 = int_to_ptr.vmem [resolvable:$true] %s21
      %24 = dma.vmem_to_smem %s22, 16, [#allocation3], [#allocation6]
    $region5: #{tpu_custom_call.1} parent=1 // pred_fallthru
      _
    // Predicated region
    $region6: #{tpu_custom_call.1} parent=1 // pred_check
      _
    $region7: #{tpu_custom_call.1} parent=1 // pred_check_branch
      %26 = sbr.rel (0) target = $region9
    $region8: #{tpu_custom_call.1} parent=1 // pred_region
      _
    $region9: #{tpu_custom_call.1} parent=1 // pred_fallthru
      _
    // Predicated region
    $region10: #{tpu_custom_call.1} parent=1 // pred_check
      _
    $region11: #{tpu_custom_call.1} parent=1 // pred_check_branch
      %28 = sbr.rel (0) target = $region13
    $region12: #{tpu_custom_call.1} parent=1 // pred_region
      %s30 = ssub.s32 256, 256
      %31 = vsyncadd [#allocation4], %s30
      %s32 = sshll.u32 [#allocation7], 4
      %s33 = int_to_ptr.vmem [resolvable:$true] %s32
      %38 = dma.hbm_to_vmem [thread:$0]  %s2, 256, %s33, [#allocation4], 128, 128, 8
    $region13: #{tpu_custom_call.1} parent=1 // pred_fallthru
      _
    // Predicated region
    $region14: #{tpu_custom_call.1} parent=1 // pred_check
      _
    $region15: #{tpu_custom_call.1} parent=1 // pred_check_branch
      %40 = sbr.rel (0) target = $region17
    $region16: #{tpu_custom_call.1} parent=1 // pred_region
      %41 = dma.done [#allocation6], 16
    $region17: #{tpu_custom_call.1} parent=1 // pred_fallthru
      _
    // Predicated region
    $region18: #{tpu_custom_call.1} parent=1 // pred_check
      _
    $region19: #{tpu_custom_call.1} parent=1 // pred_check_branch
      %43 = sbr.rel (0) target = $region21
    $region20: #{tpu_custom_call.1} parent=1 // pred_region
      %44 = dma.done [#allocation4], 256
    $region21: #{tpu_custom_call.1} parent=1 // pred_fallthru
      _
    %45 = sfence
    %s46 = sld [smem:[#allocation3]]
    %s47 = sld [smem:[#allocation3 + $0x1]]
    %v48 = vld [vmem:[#allocation7] sm:$0xff]
    %v49 = vld [vmem:[#allocation7 + $0x8] sm:$0xff]
    %v50 = vstv %s47
    %v51 = vmul.f32 %v48, %v50
    %v52 = vmul.f32 %v49, %v50
    %v53 = vmax.f32 %v51, 0.0
    %v54 = vmax.f32 %v52, 0.0
    %v55 = vmin.f32 %v53, 3.0
    %v56 = vmin.f32 %v54, 3.0
    %v57 = vround.ne.pseudo %v55
    %v58 = vround.ne.pseudo %v56
    %v59 = vstv %s46
    %v60 = vmul.f32 %v57, %v59
    %v61 = vmul.f32 %v58, %v59
    %62 = vst [vmem:[#allocation8] sm:$0xff] %v60
    %63 = vst [vmem:[#allocation8 + $0x8] sm:$0xff] %v61
    %v64 = vlaneseq
    %v65 = vshrl.u32 %v64, 7
    %v66 = vadd.s32 %v65, 8
    %v67 = vlaneseq
    %v68 = vand.u32 %v67, 127
    %s69 = smul.u32 0, 16
    %v70 = vstv %s69
    %v71 = vadd.s32 %v70, %v65
    %v72 = vadd.s32 %v70, %v66
    %v73 = vmul.u32 %v71, 128
    %v74 = vmul.u32 %v72, 128
    %v75 = vadd.s32 %v73, %v68
    %v76 = vadd.s32 %v74, %v68
    %s77 = sld [smem:[#allocation2]]
    %v78 = vstv %s77
    %vm79 = vcmp.lt.s32.totalorder %v75, %v78
    %vm80 = vcmp.lt.s32.totalorder %v76, %v78
    %v81 = vsel %vm79, %v57, 4.0
    %v82 = vsel %vm80, %v58, 4.0
    %83 = vst [vmem:[#allocation9] sm:$0xff] 0.0
    %vm84 = vcmp.eq.f32.partialorder %v81, 0.0
    %vm85 = vcmp.eq.f32.partialorder %v82, 0.0
    %v86 = vsel %vm84, 1, 0
    %v87 = vsel %vm85, 1, 0
    %v88 = vcvt.s32.f32 %v86
    %v89 = vcvt.s32.f32 %v87
    %v90 = vadd.f32 %v88, %v89
    %v91 = vrot.slane %v90, 4
    %v92 = vadd.f32 %v90, %v91
    %v93 = vrot.slane %v92, 2
    %v94 = vadd.f32 %v92, %v93
    %v95 = vrot.slane %v94, 1
    %v96 = vadd.f32 %v94, %v95
    %97 = vst [vmem:[#allocation9] sm:$0x1] %v96
    %vm98 = vcmp.eq.f32.partialorder %v81, 1.0
    %vm99 = vcmp.eq.f32.partialorder %v82, 1.0
    %v100 = vsel %vm98, 1, 0
    %v101 = vsel %vm99, 1, 0
    %v102 = vcvt.s32.f32 %v100
    %v103 = vcvt.s32.f32 %v101
    %v104 = vadd.f32 %v102, %v103
    %v105 = vrot.slane %v104, 4
    %v106 = vadd.f32 %v104, %v105
    %v107 = vrot.slane %v106, 2
    %v108 = vadd.f32 %v106, %v107
    %v109 = vrot.slane %v108, 1
    %v110 = vadd.f32 %v108, %v109
    %111 = vst [vmem:[#allocation9 + $0x1] sm:$0x1] %v110
    %vm112 = vcmp.eq.f32.partialorder %v81, 2.0
    %vm113 = vcmp.eq.f32.partialorder %v82, 2.0
    %v114 = vsel %vm112, 1, 0
    %v115 = vsel %vm113, 1, 0
    %v116 = vcvt.s32.f32 %v114
    %v117 = vcvt.s32.f32 %v115
    %v118 = vadd.f32 %v116, %v117
    %v119 = vrot.slane %v118, 4
    %v120 = vadd.f32 %v118, %v119
    %v121 = vrot.slane %v120, 2
    %v122 = vadd.f32 %v120, %v121
    %v123 = vrot.slane %v122, 1
    %v124 = vadd.f32 %v122, %v123
    %125 = vst [vmem:[#allocation9 + $0x2] sm:$0x1] %v124
    // Predicated region
    $region22: #{tpu_custom_call.1} parent=1 // pred_check
      _
    $region23: #{tpu_custom_call.1} parent=1 // pred_check_branch
      %127 = sbr.rel (0) target = $region25
    $region24: #{tpu_custom_call.1} parent=1 // pred_region
      %s129 = ssub.s32 256, 256
      %130 = vsyncadd [#allocation5], %s129
      %s131 = sshll.u32 [#allocation8], 4
      %s132 = int_to_ptr.vmem [resolvable:$true] %s131
      %137 = dma.vmem_to_hbm [thread:$0]  %s132, 256, %s3, [#allocation5], 128, 128, 8
    $region25: #{tpu_custom_call.1} parent=1 // pred_fallthru
      _
    // Predicated region
    $region26: #{tpu_custom_call.1} parent=1 // pred_check
      _
    $region27: #{tpu_custom_call.1} parent=1 // pred_check_branch
      %139 = sbr.rel (0) target = $region29
    $region28: #{tpu_custom_call.1} parent=1 // pred_region
      %s141 = ssub.s32 128, 128
      %142 = vsyncadd [#allocation10], %s141
      %s144 = sshll.u32 [#allocation9], 4
      %s145 = int_to_ptr.vmem [resolvable:$true] %s144
      %147 = dma.vmem_to_hbm [thread:$0]  %s145, 128, %s4, [#allocation10]
    $region29: #{tpu_custom_call.1} parent=1 // pred_fallthru
      _
    // Predicated region
    $region30: #{tpu_custom_call.1} parent=1 // pred_check
      _
    $region31: #{tpu_custom_call.1} parent=1 // pred_check_branch
      %149 = sbr.rel (0) target = $region33
    $region32: #{tpu_custom_call.1} parent=1 // pred_region
      %150 = dma.done [#allocation5], 256
    $region33: #{tpu_custom_call.1} parent=1 // pred_fallthru
      _
    // Predicated region
    $region34: #{tpu_custom_call.1} parent=1 // pred_check
      _
    $region35: #{tpu_custom_call.1} parent=1 // pred_check_branch
      %152 = sbr.rel (0) target = $region37
    $region36: #{tpu_custom_call.1} parent=1 // pred_region
      %153 = dma.done [#allocation10], 128
    $region37: #{tpu_custom_call.1} parent=1 // pred_fallthru
      _
    %154 = vsyncpa [#allocation4], 1
    %155 = vsyncpa [#allocation5], 1
    %156 = vsyncpa [#allocation10], 1
    %157 = vsyncpa [#allocation6], 1

</llo_original>
